<compile_context>
chip_gen: v7x
topology: tpu7x:2x2x1
jax: 0.10.0
libtpu: 0.0.40
codegen_flags: <defaults>
</compile_context>

<pallas_src>
import jax
import jax.numpy as jnp
from jax.experimental import pallas as pl
from jax.experimental.pallas import tpu as pltpu


def irt_kernel(stu_id_ref, exer_id_ref, tab_ref, out_ref):
    # stu_ids in [0, n_pad); exer_ids pre-shifted into [n_pad, 2*n_pad).
    stu_ids = stu_id_ref[...]            # (1, TB) int32
    exer_ids = exer_id_ref[...]          # (1, TB) int32
    tb = stu_ids.shape[1]
    n_comb = tab_ref.shape[1]            # 2 * n_pad

    # ONE shared iota over the combined table axis; two compares + OR build a
    # combined one-hot with exactly two non-zeros per column (one in each half).
    ridx = jax.lax.broadcasted_iota(jnp.int32, (n_comb, tb), 0)
    onehot = jnp.logical_or(ridx == stu_ids, ridx == exer_ids).astype(jnp.float32)

    # ONE merged MXU dot: the block-diagonal table zeroes out the "wrong" half
    # of each row, so every output element sums exactly one non-zero product
    # (exact f32 gather).
    g = jnp.dot(tab_ref[...], onehot, preferred_element_type=jnp.float32)  # (3, TB)
    theta = g[0:1, :]                    # student ability
    b_dif = g[1:2, :]                    # item difficulty
    a_neg = g[2:3, :]                    # -1.7 * discrimination (pre-folded)

    # sigmoid(1.7 * a * (theta - b)) == 1 / (1 + exp(a_neg * (theta - b)))
    out_ref[...] = 1.0 / (1.0 + jnp.exp(a_neg * (theta - b_dif)))


def _pick_tile_b(n_comb, vmem_budget_bytes=20 << 20):
    # Per batch-lane working set ~ 3 live (n_comb, TB) arrays (iota i32,
    # compare mask, one-hot f32) at 4 B each, plus id/output slivers.
    per_lane = 12 * n_comb + 64
    tb = vmem_budget_bytes // per_lane
    return int(min(8192, max(256, (tb // 128) * 128)))


def irt_forward(stu_id, exer_id, student_emb, k_difficulty, e_discrimination,
                *, tile_b=None):
    """stu_id, exer_id: (B,) int; embedding tables: (N, 1) f32. Returns (B,) f32."""
    B = int(stu_id.shape[0])
    n_stu = int(student_emb.shape[0])
    n_exer = int(k_difficulty.shape[0])
    n_pad = max(n_stu, n_exer)
    n_comb = 2 * n_pad

    # Clamp ids (JAX-gather semantics; PyTorch nn.Embedding would raise on
    # out-of-range ids) -- also makes the zero-padded batch tail safe.
    stu_ids = jnp.clip(stu_id.astype(jnp.int32), 0, n_stu - 1)
    exer_ids = jnp.clip(exer_id.astype(jnp.int32), 0, n_exer - 1)

    # Tile the batch (lane) axis.  A block whose last dim equals the full
    # array dim is exempt from the 128-divisibility rule, so small B runs as
    # a single block; large B uses VMEM-budget-sized tiles with >= 2 blocks
    # so both v7x TensorCores get work.
    if tile_b is not None:
        tb = min(tile_b, B) if B < tile_b else tile_b
    elif B <= 256:
        tb = B
    else:
        tb = _pick_tile_b(n_comb)
        if pl.cdiv(B, tb) < 2:
            tb = max(128, ((pl.cdiv(B, 2) + 127) // 128) * 128)

    b_pad = pl.cdiv(B, tb) * tb
    if b_pad != B:
        pad = b_pad - B
        stu_ids = jnp.pad(stu_ids, (0, pad))
        exer_ids = jnp.pad(exer_ids, (0, pad))
    stu_ids = stu_ids.reshape(1, b_pad)
    # Shift exercise ids into the second half of the combined table axis.
    exer_ids = (exer_ids + n_pad).reshape(1, b_pad)

    # Block-diagonal combined table (3, 2*n_pad):
    #   row 0: [ student_emb | 0 ]
    #   row 1: [ 0 | k_difficulty ]
    #   row 2: [ 0 | -1.7 * e_discrimination ]   (scale + negation folded here)
    f32 = jnp.float32
    zeros = jnp.zeros((n_pad,), f32)
    stu_row = zeros.at[:n_stu].set(student_emb.astype(f32)[:, 0])
    dif_row = zeros.at[:n_exer].set(k_difficulty.astype(f32)[:, 0])
    dis_row = zeros.at[:n_exer].set(-1.7 * e_discrimination.astype(f32)[:, 0])
    tab = jnp.stack([
        jnp.concatenate([stu_row, zeros]),
        jnp.concatenate([zeros, dif_row]),
        jnp.concatenate([zeros, dis_row]),
    ], axis=0)                                               # (3, n_comb)

    grid = (b_pad // tb,)
    out = pl.pallas_call(
        irt_kernel,
        out_shape=jax.ShapeDtypeStruct((1, b_pad), jnp.float32),
        grid=grid,
        in_specs=[
            pl.BlockSpec((1, tb), lambda i: (0, i)),         # student ids (streamed)
            pl.BlockSpec((1, tb), lambda i: (0, i)),         # exercise ids (streamed)
            pl.BlockSpec((3, n_comb), lambda i: (0, 0)),     # combined table (resident)
        ],
        out_specs=pl.BlockSpec((1, tb), lambda i: (0, i)),
        compiler_params=pltpu.CompilerParams(
            # Batch axis is independent -> megacore sharding on v7x; raise the
            # scoped-VMEM limit explicitly (v5e default is only 16 MiB) while
            # staying well under v7x's 64 MiB physical VMEM.
            dimension_semantics=("parallel",),
            vmem_limit_bytes=32 << 20,
        ),
        cost_estimate=pl.CostEstimate(
            flops=2 * b_pad * 3 * n_comb + 8 * b_pad,
            transcendentals=b_pad,
            bytes_accessed=4 * (3 * b_pad + 3 * n_comb),
        ),
    )(stu_ids, exer_ids, tab)

    # (1, B) lane-dense kernel output -> torch.squeeze(dim=1) semantics: (B,)
    return out[0, :B]


def irt_reference(stu_id, exer_id, student_emb, k_difficulty, e_discrimination):
    theta = student_emb[stu_id]              # (B, 1)
    b = k_difficulty[exer_id]                # (B, 1)
    a = e_discrimination[exer_id]            # (B, 1)
    out = 1.0 / (1.0 + jnp.exp(-a * 1.7 * (theta - b)))
    return jnp.squeeze(out, axis=1)


if __name__ == "__main__":
    student_n = 16
    exer_n = 32
    B = 8

    key = jax.random.PRNGKey(0)
    k1, k2, k3, k4, k5 = jax.random.split(key, 5)

    # nn.Embedding default init ~ N(0, 1); shapes (student_n, 1), (exer_n, 1).
    student_emb = jax.random.normal(k1, (student_n, 1), dtype=jnp.float32)
    k_difficulty = jax.random.normal(k2, (exer_n, 1), dtype=jnp.float32)
    e_discrimination = jax.random.normal(k3, (exer_n, 1), dtype=jnp.float32)

    stu_id = jax.random.randint(k4, (B,), 0, student_n, dtype=jnp.int32)
    exer_id = jax.random.randint(k5, (B,), 0, exer_n, dtype=jnp.int32)

    out = irt_forward(stu_id, exer_id, student_emb, k_difficulty, e_discrimination)
    out = jax.block_until_ready(out)

    ref = irt_reference(stu_id, exer_id, student_emb, k_difficulty, e_discrimination)
    assert out.shape == (B,), out.shape
    assert jnp.allclose(out, ref, atol=1e-6, rtol=1e-6), (out, ref)

    print("KERNEL_OK")
</pallas_src>

<mosaic_0001>
module attributes {stable_mosaic.version = 11 : i64} {
  func.func @irt_kernel(%arg0: i32, %arg1: memref<1x8xi32, #tpu.memory_space<vmem>>, %arg2: memref<1x8xi32, #tpu.memory_space<vmem>>, %arg3: memref<3x64xf32, #tpu.memory_space<vmem>>, %arg4: memref<1x8xf32, #tpu.memory_space<vmem>>) attributes {dimension_semantics = [#tpu.dimension_semantics<parallel>], iteration_bounds = array<i64: 1>, scalar_prefetch = 0 : i64, scratch_operands = 0 : i64, tpu.core_type = #tpu.core_type<tc>, window_params = [{transform_indices = @transform_0, window_bounds = array<i64: 1, 8>}, {transform_indices = @transform_1, window_bounds = array<i64: 1, 8>}, {pipeline_mode = #tpu.pipeline_mode<synchronous>, transform_indices = @transform_2, window_bounds = array<i64: 3, 64>}, {transform_indices = @transform_3, window_bounds = array<i64: 1, 8>}]} {
    %c0 = arith.constant 0 : index
    %c0_0 = arith.constant 0 : index
    %0 = vector.load %arg1[%c0, %c0_0] : memref<1x8xi32, #tpu.memory_space<vmem>>, vector<1x8xi32>
    %c0_1 = arith.constant 0 : index
    %c0_2 = arith.constant 0 : index
    %1 = vector.load %arg2[%c0_1, %c0_2] : memref<1x8xi32, #tpu.memory_space<vmem>>, vector<1x8xi32>
    %2 = tpu.iota {dimensions = array<i32: 0>} : vector<64x8xi32>
    %3 = vector.broadcast %0 : vector<1x8xi32> to vector<64x8xi32>
    %4 = arith.cmpi eq, %2, %3 : vector<64x8xi32>
    %5 = vector.broadcast %1 : vector<1x8xi32> to vector<64x8xi32>
    %6 = arith.cmpi eq, %2, %5 : vector<64x8xi32>
    %7 = arith.ori %4, %6 : vector<64x8xi1>
    %8 = arith.extui %7 : vector<64x8xi1> to vector<64x8xi32>
    %9 = arith.sitofp %8 : vector<64x8xi32> to vector<64x8xf32>
    %c0_3 = arith.constant 0 : index
    %c0_4 = arith.constant 0 : index
    %10 = vector.load %arg3[%c0_3, %c0_4] : memref<3x64xf32, #tpu.memory_space<vmem>>, vector<3x64xf32>
    %cst = arith.constant dense<0.000000e+00> : vector<3x8xf32>
    %11 = tpu.matmul %10, %9, %cst {dimension_numbers = #tpu.dot_dimension_numbers<[1], [0], [0], [1], [0, 0, 1, 1], [], []>} : vector<3x64xf32>, vector<64x8xf32>, vector<3x8xf32> -> vector<3x8xf32>
    %12 = vector.extract_strided_slice %11 {offsets = [0, 0], sizes = [1, 8], strides = [1, 1]} : vector<3x8xf32> to vector<1x8xf32>
    %13 = vector.extract_strided_slice %11 {offsets = [1, 0], sizes = [1, 8], strides = [1, 1]} : vector<3x8xf32> to vector<1x8xf32>
    %14 = vector.extract_strided_slice %11 {offsets = [2, 0], sizes = [1, 8], strides = [1, 1]} : vector<3x8xf32> to vector<1x8xf32>
    %15 = arith.subf %12, %13 : vector<1x8xf32>
    %16 = arith.mulf %14, %15 : vector<1x8xf32>
    %17 = math.exp %16 : vector<1x8xf32>
    %cst_5 = arith.constant 1.000000e+00 : f32
    %18 = vector.broadcast %cst_5 : f32 to vector<1x8xf32>
    %19 = arith.addf %18, %17 : vector<1x8xf32>
    %cst_6 = arith.constant 1.000000e+00 : f32
    %20 = vector.broadcast %cst_6 : f32 to vector<1x8xf32>
    %21 = arith.divf %20, %19 : vector<1x8xf32>
    %c0_7 = arith.constant 0 : index
    %c0_8 = arith.constant 0 : index
    %22 = vector.load %arg4[%c0_7, %c0_8] : memref<1x8xf32, #tpu.memory_space<vmem>>, vector<1x8xf32>
    tpu.vector_store %arg4[%c0_7, %c0_8], %21 {strides = array<i32>} : memref<1x8xf32, #tpu.memory_space<vmem>>, vector<1x8xf32>,
    return
  }
  func.func @transform_0(%arg0: i32) -> (i32, i32) {
    %c0_i32 = arith.constant 0 : i32
    %c0_i32_0 = arith.constant 0 : i32
    return %c0_i32, %arg0 : i32, i32
  }
  func.func @transform_1(%arg0: i32) -> (i32, i32) {
    %c0_i32 = arith.constant 0 : i32
    %c0_i32_0 = arith.constant 0 : i32
    return %c0_i32, %arg0 : i32, i32
  }
  func.func @transform_2(%arg0: i32) -> (i32, i32) {
    %c0_i32 = arith.constant 0 : i32
    %c0_i32_0 = arith.constant 0 : i32
    %c0_i32_1 = arith.constant 0 : i32
    return %c0_i32, %c0_i32_0 : i32, i32
  }
  func.func @transform_3(%arg0: i32) -> (i32, i32) {
    %c0_i32 = arith.constant 0 : i32
    %c0_i32_0 = arith.constant 0 : i32
    return %c0_i32, %arg0 : i32, i32
  }
}

</mosaic_0001>

<llo_original>
// kernel: tpu_custom_call.1
$region0: #{tpu_custom_call.1}
  #allocation0 [shape = 'u32[]', space=smem, size = 0x4, offset = 0x4, fixed_abs, tag = 'smem constant byte address 0x4 - core index']
  #allocation1 [shape = 'u32[144,128]{1,0:T(1,128)}', space=vmem, size = 0x12000, scoped, tag = 'internal scratch']
  %s0 = inlined_call_operand.hbm [shape: s32[1,8], index: 0, kind: input, shape index: {}]
  %s1 = inlined_call_operand.vmem [shape: s32[1,8], index: 1, kind: input, shape index: {}]
  %s2 = inlined_call_operand.vmem [shape: f32[3,64], index: 2, kind: input, shape index: {}]
  %s3 = inlined_call_operand.hbm [shape: f32[1,8], index: 3, kind: output, shape index: {}]
  %s4 = sld [smem:[#allocation0]]
  $region26: #{tpu_custom_call.1} parent=0
    _
  %s6 = ssub.s32 1, %s4
  %s7 = scalar_select 0, %s6, %s4
  $region1: #{tpu_custom_call.1} parent=0
    #allocation2 [shape = 'u8[512]{0}', space=vmem, size = 0x400, scoped, tag = 'input window, operand 0, single buffered']
    #allocation3 [shape = 's32[1]{0}', space=sflag, size = 0x4, scoped, tag = 'scoped memory for tpu_custom_call.1']
    #allocation4 [shape = 's32[1]{0}', space=sflag, size = 0x4, scoped, tag = 'scoped memory for tpu_custom_call.1']
    #allocation5 [shape = 'u8[512]{0}', space=vmem, size = 0x400, scoped, tag = 'output window, operand 0, single buffered']
    %8 = vsyncpa [#allocation3], 0
    %9 = vsyncpa [#allocation4], 0
    // Predicated region
    $region2: #{tpu_custom_call.1} parent=1 // pred_check
      _
    $region3: #{tpu_custom_call.1} parent=1 // pred_check_branch
      %11 = sbr.rel (0) target = $region5
    $region4: #{tpu_custom_call.1} parent=1 // pred_region
      %s13 = ssub.s32 16, 16
      %14 = vsyncadd [#allocation3], %s13
      %s16 = sshll.u32 [#allocation2], 4
      %s17 = int_to_ptr.vmem [resolvable:$true] %s16
      %19 = dma.hbm_to_vmem [thread:$0]  %s0, 16, %s17, [#allocation3]
    $region5: #{tpu_custom_call.1} parent=1 // pred_fallthru
      _
    // Predicated region
    $region6: #{tpu_custom_call.1} parent=1 // pred_check
      _
    $region7: #{tpu_custom_call.1} parent=1 // pred_check_branch
      %21 = sbr.rel (0) target = $region9
    $region8: #{tpu_custom_call.1} parent=1 // pred_region
      _
    $region9: #{tpu_custom_call.1} parent=1 // pred_fallthru
      _
    // Predicated region
    $region10: #{tpu_custom_call.1} parent=1 // pred_check
      _
    $region11: #{tpu_custom_call.1} parent=1 // pred_check_branch
      %23 = sbr.rel (0) target = $region13
    $region12: #{tpu_custom_call.1} parent=1 // pred_region
      _
    $region13: #{tpu_custom_call.1} parent=1 // pred_fallthru
      _
    // Predicated region
    $region14: #{tpu_custom_call.1} parent=1 // pred_check
      _
    $region15: #{tpu_custom_call.1} parent=1 // pred_check_branch
      %25 = sbr.rel (0) target = $region17
    $region16: #{tpu_custom_call.1} parent=1 // pred_region
      %26 = dma.done [#allocation3], 16
    $region17: #{tpu_custom_call.1} parent=1 // pred_fallthru
      _
    %v27 = vld [vmem:[#allocation2] sm:$0x1]
    %v28 = vld [vmem:[%s1] sm:$0x1]
    %v29 = vlaneseq
    %v30 = vshrl.u32 %v29, 7
    %v31 = vadd.s32 %v30, 8
    %v32 = vadd.s32 %v30, 16
    %v33 = vadd.s32 %v30, 24
    %v34 = vadd.s32 %v30, 32
    %v35 = vadd.s32 %v30, 40
    %v36 = vadd.s32 %v30, 48
    %v37 = vadd.s32 %v30, 56
    %v38 = vlaneseq
    %v39 = vshrl.u32 %v38, 7
    %v40 = vsub.s32 0, %v39
    %v41 = vrot.slane %v27, %v40
    %vm42 = vcmp.eq.s32.totalorder %v30, %v41
    %vm43 = vcmp.eq.s32.totalorder %v31, %v41
    %vm44 = vcmp.eq.s32.totalorder %v32, %v41
    %vm45 = vcmp.eq.s32.totalorder %v33, %v41
    %vm46 = vcmp.eq.s32.totalorder %v34, %v41
    %vm47 = vcmp.eq.s32.totalorder %v35, %v41
    %vm48 = vcmp.eq.s32.totalorder %v36, %v41
    %vm49 = vcmp.eq.s32.totalorder %v37, %v41
    %v50 = vlaneseq
    %v51 = vshrl.u32 %v50, 7
    %v52 = vsub.s32 0, %v51
    %v53 = vrot.slane %v28, %v52
    %vm54 = vcmp.eq.s32.totalorder %v30, %v53
    %vm55 = vcmp.eq.s32.totalorder %v31, %v53
    %vm56 = vcmp.eq.s32.totalorder %v32, %v53
    %vm57 = vcmp.eq.s32.totalorder %v33, %v53
    %vm58 = vcmp.eq.s32.totalorder %v34, %v53
    %vm59 = vcmp.eq.s32.totalorder %v35, %v53
    %vm60 = vcmp.eq.s32.totalorder %v36, %v53
    %vm61 = vcmp.eq.s32.totalorder %v37, %v53
    %vm62 = vmor %vm42, %vm54
    %vm63 = vmor %vm43, %vm55
    %vm64 = vmor %vm44, %vm56
    %vm65 = vmor %vm45, %vm57
    %vm66 = vmor %vm46, %vm58
    %vm67 = vmor %vm47, %vm59
    %vm68 = vmor %vm48, %vm60
    %vm69 = vmor %vm49, %vm61
    %v70 = vsel %vm62, 1, 0
    %v71 = vsel %vm63, 1, 0
    %v72 = vsel %vm64, 1, 0
    %v73 = vsel %vm65, 1, 0
    %v74 = vsel %vm66, 1, 0
    %v75 = vsel %vm67, 1, 0
    %v76 = vsel %vm68, 1, 0
    %v77 = vsel %vm69, 1, 0
    %v78 = vcvt.s32.f32 %v70
    %v79 = vcvt.s32.f32 %v71
    %v80 = vcvt.s32.f32 %v72
    %v81 = vcvt.s32.f32 %v73
    %v82 = vcvt.s32.f32 %v74
    %v83 = vcvt.s32.f32 %v75
    %v84 = vcvt.s32.f32 %v76
    %v85 = vcvt.s32.f32 %v77
    %v86 = vld [vmem:[%s2] sm:$0x7]
    %vm87 = vcmask 523264
    %v89 = vsel %vm87, %v86, 0
    %91 = vmatprep.subr.mxu0 0.0
    %92 = vmatpush1.msra.mxu0 %v78
    %93 = vmatprep.subr.mxu0 0.0
    %94 = vmatpush1.msra.mxu0 %v79
    %95 = vmatprep.subr.mxu0 0.0
    %96 = vmatpush1.msra.mxu0 %v80
    %97 = vmatprep.subr.mxu0 0.0
    %98 = vmatpush1.msra.mxu0 %v81
    %99 = vmatprep.subr.mxu0 0.0
    %100 = vmatpush1.msra.mxu0 %v82
    %101 = vmatprep.subr.mxu0 0.0
    %102 = vmatpush1.msra.mxu0 %v83
    %103 = vmatprep.subr.mxu0 0.0
    %104 = vmatpush1.msra.mxu0 %v84
    %105 = vmatprep.subr.mxu0 0.0
    %106 = vmatpush1.msra.mxu0 %v85
    %107 = vmatprep.subr.mxu0 0.0
    %108 = vmatpush1.msra.mxu0 0.0
    %109 = vmatprep.subr.mxu0 0.0
    %110 = vmatpush1.msra.mxu0 0.0
    %111 = vmatprep.subr.mxu0 0.0
    %112 = vmatpush1.msra.mxu0 0.0
    %113 = vmatprep.subr.mxu0 0.0
    %114 = vmatpush1.msra.mxu0 0.0
    %115 = vmatprep.subr.mxu0 0.0
    %116 = vmatpush1.msra.mxu0 0.0
    %117 = vmatprep.subr.mxu0 0.0
    %118 = vmatpush1.msra.mxu0 0.0
    %119 = vmatprep.subr.mxu0 0.0
    %120 = vmatpush1.msra.mxu0 0.0
    %121 = vmatprep.subr.mxu0 0.0
    %122 = vmatpush1.msra.mxu0 0.0
    %123 = vmatprep.subr.mxu0 0.0
    %124 = vmatpush1.msra.mxu0 0.0
    %125 = vmatprep.subr.mxu0 0.0
    %126 = vmatpush1.msra.mxu0 0.0
    %127 = vmatprep.subr.mxu0 0.0
    %128 = vmatpush1.msra.mxu0 0.0
    %129 = vmatprep.subr.mxu0 0.0
    %130 = vmatpush1.msra.mxu0 0.0
    %131 = vmatprep.subr.mxu0 0.0
    %132 = vmatpush1.msra.mxu0 0.0
    %133 = vmatprep.subr.mxu0 0.0
    %134 = vmatpush1.msra.mxu0 0.0
    %135 = vmatprep.subr.mxu0 0.0
    %136 = vmatpush1.msra.mxu0 0.0
    %137 = vmatprep.subr.mxu0 0.0
    %138 = vmatpush1.msra.mxu0 0.0
    %139 = vmatprep.subr.mxu0 0.0
    %140 = vmatpush1.msra.mxu0 0.0
    %141 = vmatprep.subr.mxu0 0.0
    %142 = vmatpush1.msra.mxu0 0.0
    %143 = vmatprep.subr.mxu0 0.0
    %144 = vmatpush1.msra.mxu0 0.0
    %145 = vmatprep.subr.mxu0 0.0
    %146 = vmatpush1.msra.mxu0 0.0
    %147 = vmatprep.subr.mxu0 0.0
    %148 = vmatpush1.msra.mxu0 0.0
    %149 = vmatprep.subr.mxu0 0.0
    %150 = vmatpush1.msra.mxu0 0.0
    %151 = vmatprep.subr.mxu0 0.0
    %152 = vmatpush1.msra.mxu0 0.0
    %153 = vmatprep.subr.mxu0 0.0
    %154 = vmatpush1.msra.mxu0 0.0
    %155 = vmatprep.mubr.f32.mxu0 0.0
    %156 = vmatmul.mubr.f32.gmra.mrb[0].mxu0 %v89
    %v157 = vpop.f32.mrb[0].mxu0
    %v158 = vadd.f32 0.0, %v157
    %v159 = vpop.f32.mrb[0].mxu0
    %160 = vdwg.mxu0
    %v162 = vrot.slane %v158, 1
    %v164 = vsub.f32 %v158, %v162
    %v166 = vrot.slane %v164, 6
    %v168 = vmul.f32 %v158, %v166
    %v169 = vmul.f32 %v168, 1.442695
    %v170 = vpow.pop %v169
    %v171 = vadd.f32 %v170, 1.0
    %v172 = vrcp.pop %v171
    %v173 = vmul.f32 1.0, %v172
    %vm174 = vcmask 59394
    %175 = vst.msk [vmem:[#allocation5 - $0x2] sm:$0x4] %vm174, %v173
    // Predicated region
    $region18: #{tpu_custom_call.1} parent=1 // pred_check
      _
    $region19: #{tpu_custom_call.1} parent=1 // pred_check_branch
      %177 = sbr.rel (0) target = $region21
    $region20: #{tpu_custom_call.1} parent=1 // pred_region
      %s179 = ssub.s32 16, 16
      %180 = vsyncadd [#allocation4], %s179
      %s182 = sshll.u32 [#allocation5], 4
      %s183 = int_to_ptr.vmem [resolvable:$true] %s182
      %185 = dma.vmem_to_hbm [thread:$0]  %s183, 16, %s3, [#allocation4]
    $region21: #{tpu_custom_call.1} parent=1 // pred_fallthru
      _
    // Predicated region
    $region22: #{tpu_custom_call.1} parent=1 // pred_check
      _
    $region23: #{tpu_custom_call.1} parent=1 // pred_check_branch
      %187 = sbr.rel (0) target = $region25
    $region24: #{tpu_custom_call.1} parent=1 // pred_region
      %188 = dma.done [#allocation4], 16
    $region25: #{tpu_custom_call.1} parent=1 // pred_fallthru
      _
    %189 = vsyncpa [#allocation3], 1
    %190 = vsyncpa [#allocation4], 1

</llo_original>
